<compile_context>
chip_gen: v7x
topology: tpu7x:2x2x1
jax: 0.10.0
libtpu: 0.0.40
codegen_flags: <defaults>
</compile_context>

<pallas_src>
import functools

import jax
import jax.numpy as jnp
from jax import lax
from jax.experimental import pallas as pl
from jax.experimental.pallas import tpu as pltpu


def _group_mean_var(xf, G, M):
    """Two-pass group mean/variance over rows n = g*M + m, reduced over g.

    xf: (G*M, TK) float32.  Returns (mu, var), each (M, TK).
    """
    inv_g = 1.0 / float(G)
    if M % 8 == 0 or G > 16:
        # Sublane-aligned (or too many groups to unroll): reshape path.
        tk = xf.shape[-1]
        xg = xf.reshape(G, M, tk)
        mu = jnp.mean(xg, axis=0)
        var = jnp.mean(jnp.square(xg - mu), axis=0)
        return mu, var
    # Short unrolled contiguous-slab sum (avoids a per-chunk sublane relayout
    # when M is not a multiple of 8 — the common StyleGAN2 configuration).
    slabs = [xf[g * M:(g + 1) * M, :] for g in range(G)]
    mu = slabs[0]
    for s in slabs[1:]:
        mu = mu + s
    mu = mu * inv_g
    var = jnp.square(slabs[0] - mu)
    for s in slabs[1:]:
        var = var + jnp.square(s - mu)
    var = var * inv_g
    return mu, var


def _tiled_kernel(x_ref, o_ref, acc_ref, *, G, M, Fc, cHW, HWs, TK, nK):
    """Grid = (nK + nS,) column chunks over the flattened output (N, Kout).

    Steps [0, nK)   : copy the chunk through + accumulate group-std partials.
    Steps [nK, ...) : broadcast the finished statistic into the std columns.
    """
    i = pl.program_id(0)
    N = G * M

    @pl.when(i == 0)
    def _init():
        # Correct only because the grid axis is sequential on one core
        # ("arbitrary"); a multi-core split would need per-core init/reduce.
        acc_ref[...] = jnp.zeros_like(acc_ref)

    @pl.when(i < nK)
    def _copy_and_accumulate():
        xb = x_ref[...]                               # (N, TK), original dtype
        o_ref[...] = xb                               # lane-dense pass-through

        xf = xb.astype(jnp.float32)
        mu, var = _group_mean_var(xf, G, M)           # (M, TK), two-pass
        std = jnp.sqrt(var + 1e-8)                    # (M, TK)
        part = jnp.sum(std, axis=1, keepdims=True)    # (M, 1) lane reduction

        if Fc == 1:
            acc_ref[...] += part
        else:
            # TK divides cHW, so this entire chunk belongs to one std feature.
            f = (i * TK) // cHW                       # traced scalar
            onehot = (lax.broadcasted_iota(jnp.int32, (1, Fc), 1) == f)
            acc_ref[...] += part * onehot.astype(jnp.float32)

    @pl.when(i >= nK)
    def _write_std_channels():
        stat = acc_ref[...] * (1.0 / float(cHW))      # (M, Fc)
        rep = jnp.tile(stat, (G, 1))                  # (N, Fc): row n -> n % M
        if Fc == 1:
            block = jnp.broadcast_to(rep, (N, TK))
        else:
            j = i - nK
            col = lax.broadcasted_iota(jnp.int32, (1, TK), 1) + j * TK
            feat = jnp.minimum(col // HWs, Fc - 1)    # (1, TK)
            block = jnp.broadcast_to(rep[:, 0:1], (N, TK))
            for f in range(1, Fc):                    # only runs nS (few) times
                block = jnp.where(feat == f, rep[:, f:f + 1], block)
        o_ref[...] = block.astype(o_ref.dtype)


def _single_block_kernel(x_ref, o_ref, *, G, M, Fc, cHW, HWs, K):
    """Fallback for shapes whose per-feature width cHW is not 128-aligned."""
    N = G * M
    xb = x_ref[...]
    o_ref[:, :K] = xb
    xf = xb.astype(jnp.float32)
    mu, var = _group_mean_var(xf, G, M)
    std = jnp.sqrt(var + 1e-8)                        # (M, K)
    cols = []
    for f in range(Fc):
        stat_f = jnp.mean(std[:, f * cHW:(f + 1) * cHW], axis=1, keepdims=True)
        rep_f = jnp.tile(stat_f, (G, 1))              # (N, 1)
        cols.append(jnp.broadcast_to(rep_f, (N, HWs)))
    tail = cols[0] if Fc == 1 else jnp.concatenate(cols, axis=1)
    o_ref[:, K:] = tail.astype(o_ref.dtype)


def _largest_aligned_divisor(n, cap):
    """Largest divisor of n that is a multiple of 128 and <= cap (0 if none)."""
    if n <= 0 or n % 128 != 0:
        return 0
    m = n // 128
    best = 0
    for d in range(1, m + 1):
        if m % d == 0 and d * 128 <= cap:
            best = max(best, d * 128)
    return best


def minibatch_std_layer(x, group_size, num_channels=1):
    """Pallas implementation of MinibatchStdLayer.forward (NCHW)."""
    N, C, H, W = x.shape
    G = int(min(group_size, N)) if group_size is not None else int(N)
    Fc = int(num_channels)
    if N % G != 0:
        raise ValueError(f"batch {N} must be divisible by group size {G}")
    if C % Fc != 0:
        raise ValueError(f"channels {C} must be divisible by num_channels {Fc}")
    M = N // G
    c = C // Fc
    HWs = H * W
    K = C * HWs               # flattened pass-through width
    cHW = c * HWs             # input columns per std feature
    statW = Fc * HWs          # flattened std-channel width
    Kout = K + statW
    itemsize = x.dtype.itemsize

    x2 = x.reshape(N, K)      # glue reshape only (no compute, no copy)

    # Block sizing: ~6 MiB per (N, TK) block; input + output blocks are each
    # double-buffered -> ~24 MiB live, within v7x's 64 MiB VMEM with headroom.
    target_block_bytes = 6 * 1024 * 1024
    cap = max(128, target_block_bytes // max(1, N * itemsize))
    # TK must divide cHW (so every copy chunk belongs to exactly one std
    # feature) and be a multiple of 128 (lane-dense, unmasked stores).
    TK = _largest_aligned_divisor(cHW, cap)

    cost = pl.CostEstimate(
        flops=8 * N * K,
        transcendentals=M * K,
        bytes_accessed=(N * K + N * Kout) * itemsize,
    )

    if TK:
        nK = K // TK
        nS = (statW + TK - 1) // TK
        kernel = functools.partial(
            _tiled_kernel, G=G, M=M, Fc=Fc, cHW=cHW, HWs=HWs, TK=TK, nK=nK
        )
        out_flat = pl.pallas_call(
            kernel,
            out_shape=jax.ShapeDtypeStruct((N, Kout), x.dtype),
            grid=(nK + nS,),
            in_specs=[
                # Clamp so the finalize steps don't fetch any new block.
                pl.BlockSpec((N, TK), lambda i: (0, jnp.minimum(i, nK - 1))),
            ],
            out_specs=pl.BlockSpec((N, TK), lambda i: (0, i)),
            scratch_shapes=[pltpu.VMEM((M, Fc), jnp.float32)],
            compiler_params=pltpu.CompilerParams(
                dimension_semantics=("arbitrary",),
                vmem_limit_bytes=48 * 1024 * 1024,
            ),
            cost_estimate=cost,
        )(x2)
    else:
        # Rare path: per-feature width not 128-aligned.  Single whole-array
        # block (still exactly one HBM read of x + one HBM write of out).
        # TODO(synk): pipeline this path over row tiles if an unaligned shape
        # ever shows up in production.
        need = 2 * (N * K + N * Kout) * itemsize + (1 << 20)
        kernel = functools.partial(
            _single_block_kernel, G=G, M=M, Fc=Fc, cHW=cHW, HWs=HWs, K=K
        )
        out_flat = pl.pallas_call(
            kernel,
            out_shape=jax.ShapeDtypeStruct((N, Kout), x.dtype),
            grid=(1,),
            in_specs=[pl.BlockSpec((N, K), lambda i: (0, 0))],
            out_specs=pl.BlockSpec((N, Kout), lambda i: (0, 0)),
            compiler_params=pltpu.CompilerParams(
                dimension_semantics=("arbitrary",),
                vmem_limit_bytes=min(96 * 1024 * 1024,
                                     max(32 * 1024 * 1024, need)),
            ),
            cost_estimate=cost,
        )(x2)

    return out_flat.reshape(N, C + Fc, H, W)


def ref_minibatch_std(x, group_size, num_channels=1):
    """Pure-JAX reference mirroring the PyTorch forward exactly (two-pass)."""
    N, C, H, W = x.shape
    G = min(group_size, N) if group_size is not None else N
    Fc = num_channels
    c = C // Fc
    y = x.reshape(G, -1, Fc, c, H, W)
    y = y - y.mean(axis=0)
    y = jnp.mean(jnp.square(y), axis=0)
    y = jnp.sqrt(y + 1e-8)
    y = y.mean(axis=(2, 3, 4))
    y = y.reshape(-1, Fc, 1, 1)
    y = jnp.tile(y, (G, 1, H, W))
    return jnp.concatenate([x, y], axis=1)


if __name__ == "__main__":
    key = jax.random.PRNGKey(0)
    k1, k2 = jax.random.split(key)

    # Case 1: module defaults (group_size=2, num_channels=1), NCHW input.
    x1 = jax.random.normal(k1, (2, 4, 16, 16), dtype=jnp.float32)
    out1 = jax.block_until_ready(minibatch_std_layer(x1, 2, 1))
    exp1 = ref_minibatch_std(x1, 2, 1)
    assert out1.shape == (2, 5, 16, 16), out1.shape
    assert jnp.allclose(out1, exp1, atol=1e-5, rtol=1e-5), float(
        jnp.max(jnp.abs(out1 - exp1))
    )

    # Case 2: num_channels=2 exercises multi-feature accumulate + finalize.
    x2 = jax.random.normal(k2, (4, 4, 16, 16), dtype=jnp.float32)
    out2 = jax.block_until_ready(minibatch_std_layer(x2, 2, 2))
    exp2 = ref_minibatch_std(x2, 2, 2)
    assert out2.shape == (4, 6, 16, 16), out2.shape
    assert jnp.allclose(out2, exp2, atol=1e-5, rtol=1e-5), float(
        jnp.max(jnp.abs(out2 - exp2))
    )

    print("KERNEL_OK")
</pallas_src>

<mosaic_0001>
module attributes {stable_mosaic.version = 11 : i64} {
  func.func @_tiled_kernel(%arg0: i32, %arg1: memref<2x1024xf32, #tpu.memory_space<vmem>>, %arg2: memref<2x1024xf32, #tpu.memory_space<vmem>>, %arg3: memref<1x1xf32, #tpu.memory_space<vmem>>) attributes {dimension_semantics = [#tpu.dimension_semantics<arbitrary>], iteration_bounds = array<i64: 2>, scalar_prefetch = 0 : i64, scratch_operands = 1 : i64, tpu.core_type = #tpu.core_type<tc>, window_params = [{transform_indices = @transform_0, window_bounds = array<i64: 2, 1024>}, {transform_indices = @transform_1, window_bounds = array<i64: 2, 1024>}]} {
    %c0_i32 = arith.constant 0 : i32
    %0 = arith.cmpi eq, %arg0, %c0_i32 : i32
    %1 = arith.extui %0 : i1 to i32
    %c0_i32_0 = arith.constant 0 : i32
    %2 = arith.cmpi ne, %1, %c0_i32_0 : i32
    scf.if %2 {
      %cst = arith.constant 0.000000e+00 : f32
      %9 = vector.broadcast %cst : f32 to vector<1x1xf32>
      %c0 = arith.constant 0 : index
      %c0_4 = arith.constant 0 : index
      %10 = vector.load %arg3[%c0, %c0_4] : memref<1x1xf32, #tpu.memory_space<vmem>>, vector<1x1xf32>
      tpu.vector_store %arg3[%c0, %c0_4], %9 {strides = array<i32>} : memref<1x1xf32, #tpu.memory_space<vmem>>, vector<1x1xf32>,
    } else {
    }
    %c1_i32 = arith.constant 1 : i32
    %3 = arith.cmpi slt, %arg0, %c1_i32 : i32
    %4 = arith.extui %3 : i1 to i32
    %c0_i32_1 = arith.constant 0 : i32
    %5 = arith.cmpi ne, %4, %c0_i32_1 : i32
    scf.if %5 {
      %c0 = arith.constant 0 : index
      %c0_4 = arith.constant 0 : index
      %9 = vector.load %arg1[%c0, %c0_4] : memref<2x1024xf32, #tpu.memory_space<vmem>>, vector<2x1024xf32>
      %c0_5 = arith.constant 0 : index
      %c0_6 = arith.constant 0 : index
      %10 = vector.load %arg2[%c0_5, %c0_6] : memref<2x1024xf32, #tpu.memory_space<vmem>>, vector<2x1024xf32>
      tpu.vector_store %arg2[%c0_5, %c0_6], %9 {strides = array<i32>} : memref<2x1024xf32, #tpu.memory_space<vmem>>, vector<2x1024xf32>,
      %11 = vector.extract_strided_slice %9 {offsets = [0, 0], sizes = [1, 1024], strides = [1, 1]} : vector<2x1024xf32> to vector<1x1024xf32>
      %12 = vector.extract_strided_slice %9 {offsets = [1, 0], sizes = [1, 1024], strides = [1, 1]} : vector<2x1024xf32> to vector<1x1024xf32>
      %13 = arith.addf %11, %12 : vector<1x1024xf32>
      %cst = arith.constant 5.000000e-01 : f32
      %14 = vector.broadcast %cst : f32 to vector<1x1024xf32>
      %15 = arith.mulf %13, %14 : vector<1x1024xf32>
      %16 = arith.subf %11, %15 : vector<1x1024xf32>
      %17 = arith.mulf %16, %16 : vector<1x1024xf32>
      %18 = arith.subf %12, %15 : vector<1x1024xf32>
      %19 = arith.mulf %18, %18 : vector<1x1024xf32>
      %20 = arith.addf %17, %19 : vector<1x1024xf32>
      %cst_7 = arith.constant 5.000000e-01 : f32
      %21 = vector.broadcast %cst_7 : f32 to vector<1x1024xf32>
      %22 = arith.mulf %20, %21 : vector<1x1024xf32>
      %cst_8 = arith.constant 9.99999993E-9 : f32
      %23 = vector.broadcast %cst_8 : f32 to vector<1x1024xf32>
      %24 = arith.addf %22, %23 : vector<1x1024xf32>
      %25 = math.sqrt %24 : vector<1x1024xf32>
      %cst_9 = arith.constant dense<0.000000e+00> : vector<1xf32>
      %26 = vector.multi_reduction <add>, %25, %cst_9 [1] : vector<1x1024xf32> to vector<1xf32>
      %27 = vector.shape_cast %26 : vector<1xf32> to vector<1x1xf32>
      %c0_10 = arith.constant 0 : index
      %c0_11 = arith.constant 0 : index
      %28 = vector.load %arg3[%c0_10, %c0_11] : memref<1x1xf32, #tpu.memory_space<vmem>>, vector<1x1xf32>
      %29 = arith.addf %28, %27 : vector<1x1xf32>
      %c0_12 = arith.constant 0 : index
      %c0_13 = arith.constant 0 : index
      %30 = vector.load %arg3[%c0_12, %c0_13] : memref<1x1xf32, #tpu.memory_space<vmem>>, vector<1x1xf32>
      tpu.vector_store %arg3[%c0_12, %c0_13], %29 {strides = array<i32>} : memref<1x1xf32, #tpu.memory_space<vmem>>, vector<1x1xf32>,
    } else {
    }
    %c1_i32_2 = arith.constant 1 : i32
    %6 = arith.cmpi sge, %arg0, %c1_i32_2 : i32
    %7 = arith.extui %6 : i1 to i32
    %c0_i32_3 = arith.constant 0 : i32
    %8 = arith.cmpi ne, %7, %c0_i32_3 : i32
    scf.if %8 {
      %c0 = arith.constant 0 : index
      %c0_4 = arith.constant 0 : index
      %9 = vector.load %arg3[%c0, %c0_4] : memref<1x1xf32, #tpu.memory_space<vmem>>, vector<1x1xf32>
      %cst = arith.constant 9.765625E-4 : f32
      %10 = vector.broadcast %cst : f32 to vector<1x1xf32>
      %11 = arith.mulf %9, %10 : vector<1x1xf32>
      %12 = tpu.concatenate %11, %11 in 0 : vector<1x1xf32>, vector<1x1xf32> -> vector<2x1xf32>
      %13 = vector.shape_cast %12 : vector<2x1xf32> to vector<2x1xf32>
      %14 = vector.broadcast %13 : vector<2x1xf32> to vector<2x1024xf32>
      %c0_5 = arith.constant 0 : index
      %c0_6 = arith.constant 0 : index
      %15 = vector.load %arg2[%c0_5, %c0_6] : memref<2x1024xf32, #tpu.memory_space<vmem>>, vector<2x1024xf32>
      tpu.vector_store %arg2[%c0_5, %c0_6], %14 {strides = array<i32>} : memref<2x1024xf32, #tpu.memory_space<vmem>>, vector<2x1024xf32>,
    } else {
    }
    return
  }
  func.func @transform_0(%arg0: i32) -> (i32, i32) {
    %c0_i32 = arith.constant 0 : i32
    %0 = arith.minsi %arg0, %c0_i32 : i32
    %c0_i32_0 = arith.constant 0 : i32
    %c0_i32_1 = arith.constant 0 : i32
    return %c0_i32_0, %0 : i32, i32
  }
  func.func @transform_1(%arg0: i32) -> (i32, i32) {
    %c0_i32 = arith.constant 0 : i32
    %c0_i32_0 = arith.constant 0 : i32
    return %c0_i32, %arg0 : i32, i32
  }
}

</mosaic_0001>

<llo_original>
// kernel: tpu_custom_call.1
$region0: #{tpu_custom_call.1}
  #allocation0 [shape = 'u32[]', space=smem, size = 0x4, offset = 0x4, fixed_abs, tag = 'smem constant byte address 0x4 - core index']
  #allocation1 [shape = 'u32[144,128]{1,0:T(1,128)}', space=vmem, size = 0x12000, scoped, tag = 'internal scratch']
  #allocation2 [shape = 'f32[1,1]{1,0:T(1,128)}', space=vmem, size = 0x200, scoped, tag = 'scratch operand']
  %s0 = inlined_call_operand.hbm [shape: f32[2,1024], index: 0, kind: input, shape index: {}]
  %s1 = inlined_call_operand.hbm [shape: f32[2,1280], index: 1, kind: output, shape index: {}]
  %s2 = sld [smem:[#allocation0]]
  $region53: #{tpu_custom_call.1} parent=0
    _
  %s4 = ssub.s32 1, %s2
  %s5 = scalar_select 0, %s4, %s2
  $region1: #{tpu_custom_call.1} parent=0
    #allocation3 [shape = 'u8[16384]{0}', space=vmem, size = 0x4000, scoped, tag = 'input window, operand 0']
    #allocation4 [shape = 's32[2]{0}', space=sflag, size = 0x8, scoped, tag = 'scoped memory for tpu_custom_call.1']
    #allocation5 [shape = 's32[2]{0}', space=sflag, size = 0x8, scoped, tag = 'scoped memory for tpu_custom_call.1']
    #allocation6 [shape = 'u8[16384]{0}', space=vmem, size = 0x4000, scoped, tag = 'output window, operand 0']
    %6 = vsyncpa [#allocation4], 0
    %s7 = scalar_lea.sflag [#allocation4], 1
    %8 = vsyncpa %s7, 0
    %9 = vsyncpa [#allocation5], 0
    %s10 = scalar_lea.sflag [#allocation5], 1
    %11 = vsyncpa %s10, 0
    loop: start=0, step=1, limit=4
    $region2: #{tpu_custom_call.1} parent=1 // loop_pre_header
      _
    $region3: #{tpu_custom_call.1} parent=1 // loop_header
      %s13 = sphi 0, %s17
      %p14 = scmp.ge.s32.totalorder %s13, 4
      %s27 = sphi 0, %s29
      %s30 = sphi 0, %s27
      %s31 = sphi 0, %s30
      %s47 = sphi 0, %s31
      %s53 = sphi 0, %s55
      %s56 = sphi 0, %s53
      %s57 = sphi 0, %s56
      %s73 = sphi 0, %s57
    $region4: #{tpu_custom_call.1} parent=1 // loop_header_branch
      %16 = sbr.rel (%p14) target = $region8
    $region5: #{tpu_custom_call.1} parent=1 // loop_body
      %s18 = ssub.s32 %s13, 1
      %s19 = ssub.s32 %s13, 2
      %s20 = sadd.s32 %s13, 1
      %p21 = scmp.lt.s32.totalorder %s13, 0
      %s22 = scalar_select %p21, %s13, 0
      %p23 = scmp.lt.s32.totalorder %s20, 0
      %s24 = scalar_select %p23, %s20, 0
      %s25 = ssub.s32 %s22, %s24
      %p26 = scmp.eq.s32.totalorder %s25, 0
      %s28 = sadd.s32 %s27, 1
      %s29 = scalar_select %p26, %s27, %s28
      %p32 = pneg %p26
      %p33 = scmp.eq.s32.totalorder %s13, 1
      %p34 = por %p32, %p33
      %p35 = scmp.ne.s32.totalorder %s27, %s30
      %p36 = scmp.eq.s32.totalorder %s13, 0
      %p37 = por %p35, %p36
      %p38 = scmp.ne.s32.totalorder %s27, %s30
      %p39 = scmp.eq.s32.totalorder %s18, 1
      %p40 = por %p38, %p39
      %p41 = scmp.ne.s32.totalorder %s30, %s31
      %p42 = scmp.eq.s32.totalorder %s18, 0
      %p43 = por %p41, %p42
      %p44 = scmp.ne.s32.totalorder %s30, %s31
      %p45 = scmp.eq.s32.totalorder %s19, 1
      %p46 = por %p44, %p45
      %p48 = scmp.ne.s32.totalorder %s31, %s47
      %p49 = scmp.eq.s32.totalorder %s19, 0
      %p50 = por %p48, %p49
      %s51 = ssub.s32 %s13, %s20
      %p52 = scmp.eq.s32.totalorder %s51, 0
      %s54 = sadd.s32 %s53, 1
      %s55 = scalar_select %p52, %s53, %s54
      %p58 = pneg %p52
      %p59 = scmp.eq.s32.totalorder %s13, 1
      %p60 = por %p58, %p59
      %p61 = scmp.ne.s32.totalorder %s53, %s56
      %p62 = scmp.eq.s32.totalorder %s13, 0
      %p63 = por %p61, %p62
      %p64 = scmp.ne.s32.totalorder %s53, %s56
      %p65 = scmp.eq.s32.totalorder %s18, 1
      %p66 = por %p64, %p65
      %p67 = scmp.ne.s32.totalorder %s56, %s57
      %p68 = scmp.eq.s32.totalorder %s18, 0
      %p69 = por %p67, %p68
      %p70 = scmp.ne.s32.totalorder %s56, %s57
      %p71 = scmp.eq.s32.totalorder %s19, 1
      %p72 = por %p70, %p71
      %p74 = scmp.ne.s32.totalorder %s57, %s73
      %p75 = scmp.eq.s32.totalorder %s19, 0
      %p76 = por %p74, %p75
      %p77 = scmp.le.s32.totalorder 1, %s13
      %p78 = scmp.lt.s32.totalorder %s13, 3
      %p79 = pnand %p77, %p78
      %p80 = pneg %p79
      // Predicated region
      $region9: #{tpu_custom_call.1} parent=5 // pred_check
        _
      $region10: #{tpu_custom_call.1} parent=5 // pred_check_branch
        %82 = sbr.rel (%p79) target = $region12
      $region11: #{tpu_custom_call.1} parent=5 // pred_region
        %s83 = ssub.s32 %s13, 1
      $region12: #{tpu_custom_call.1} parent=5 // pred_fallthru
        _
      %p84 = scmp.lt.s32.totalorder %s13, 2
      // Predicated region
      $region13: #{tpu_custom_call.1} parent=5 // pred_check
        %p85 = pneg %p84
      $region14: #{tpu_custom_call.1} parent=5 // pred_check_branch
        %87 = sbr.rel (%p85) target = $region16
      $region15: #{tpu_custom_call.1} parent=5 // pred_region
        // Predicated region
        $region17: #{tpu_custom_call.1} parent=15 // pred_check
          %p88 = pneg %p37
        $region18: #{tpu_custom_call.1} parent=15 // pred_check_branch
          %90 = sbr.rel (%p88) target = $region20
        $region19: #{tpu_custom_call.1} parent=15 // pred_region
          %s91 = sand.u32 %s27, 1
          %s92 = scalar_lea.sflag [#allocation4], %s91
          %s93 = sand.u32 %s27, 1
          %s94 = smul.addr %s93, 16
          %s95 = scalar_lea.vmem [#allocation3], %s94
          %p96 = scmp.lt.s32.totalorder %s13, 0
          %s97 = scalar_select %p96, %s13, 0
          %s98 = smul.u32 8, %s97
          %s100 = ssub.s32 256, 256
          %101 = vsyncadd %s92, %s100
          %s102 = smul.addr %s98, 32
          %s103 = scalar_lea.hbm %s0, %s102
          %s105 = sshll.u32 %s95, 4
          %s106 = int_to_ptr.vmem [resolvable:$true] %s105
          %108 = dma.hbm_to_vmem [thread:$0]  %s103, 256, %s106, %s92
        $region20: #{tpu_custom_call.1} parent=15 // pred_fallthru
          _
      $region16: #{tpu_custom_call.1} parent=5 // pred_fallthru
        _
      %p109 = scmp.le.s32.totalorder 1, %s13
      %p110 = scmp.lt.s32.totalorder %s13, 3
      %p111 = pnand %p109, %p110
      %p112 = pneg %p111
      // Predicated region
      $region21: #{tpu_custom_call.1} parent=5 // pred_check
        _
      $region22: #{tpu_custom_call.1} parent=5 // pred_check_branch
        %114 = sbr.rel (%p111) target = $region24
      $region23: #{tpu_custom_call.1} parent=5 // pred_region
        %s115 = ssub.s32 %s13, 1
        %s116 = sand.u32 %s30, 1
        %s117 = scalar_lea.sflag [#allocation4], %s116
        %s118 = sand.u32 %s30, 1
        %s119 = smul.addr %s118, 16
        %s120 = scalar_lea.vmem [#allocation3], %s119
        // Predicated region
        $region25: #{tpu_custom_call.1} parent=23 // pred_check
          %p121 = pneg %p43
        $region26: #{tpu_custom_call.1} parent=23 // pred_check_branch
          %123 = sbr.rel (%p121) target = $region28
        $region27: #{tpu_custom_call.1} parent=23 // pred_region
          %124 = dma.done %s117, 256
        $region28: #{tpu_custom_call.1} parent=23 // pred_fallthru
          _
        %s125 = sand.u32 %s30, 1
        %s126 = scalar_lea.sflag [#allocation4], %s125
        %s127 = sand.u32 %s30, 1
        %s128 = smul.addr %s127, 16
        %s129 = scalar_lea.vmem [#allocation3], %s128
        %p130 = pneg %p43
        %p131 = pneg %p40
        %p132 = pneg %p69
        %p133 = pneg %p66
        %s134 = sand.u32 %s56, 1
        %s135 = scalar_lea.sflag [#allocation5], %s134
        %s136 = sand.u32 %s56, 1
        %s137 = smul.addr %s136, 16
        %s138 = scalar_lea.vmem [#allocation6], %s137
        %p139 = scmp.lt.s32.totalorder %s18, 0
        %s140 = scalar_select %p139, %s18, 0
        %s141 = smul.u32 8, %s140
        %s142 = smul.u32 8, %s18
        %s143 = ssub.s32 10, %s142
        %p144 = scmp.lt.s32.totalorder %s143, 8
        %s145 = scalar_select %p144, %s143, 8
        %s146 = smul.u32 32, %s145
        %p147 = scmp.eq.s32.totalorder %s18, 0
        // Predicated region
        $region29: #{tpu_custom_call.1} parent=23 // pred_check
          %p148 = pneg %p147
        $region30: #{tpu_custom_call.1} parent=23 // pred_check_branch
          %150 = sbr.rel (%p148) target = $region32
        $region31: #{tpu_custom_call.1} parent=23 // pred_region
          %vm151 = vcmask 0
          %152 = vst.msk [vmem:[#allocation2] sm:$0x1] %vm151, 0.0
        $region32: #{tpu_custom_call.1} parent=23 // pred_fallthru
          _
        %p153 = scmp.lt.s32.totalorder %s18, 1
        // Predicated region
        $region33: #{tpu_custom_call.1} parent=23 // pred_check
          %p154 = pneg %p153
        $region34: #{tpu_custom_call.1} parent=23 // pred_check_branch
          %156 = sbr.rel (%p154) target = $region36
        $region35: #{tpu_custom_call.1} parent=23 // pred_region
          %v157 = vld [vmem:[%s120] sm:$0xff]
          %v158 = vld [vmem:[%s120 + $0x8] sm:$0xff]
          %159 = vst [vmem:[%s138] sm:$0xff] %v157
          %160 = vst [vmem:[%s138 + $0x8] sm:$0xff] %v158
          %v163 = vrot.slane %v157, 7
          %v164 = vrot.slane %v163, 2
          %v165 = vrot.slane %v158, 7
          %v166 = vrot.slane %v165, 2
          %v169 = vadd.f32 %v157, %v164
          %v170 = vadd.f32 %v158, %v166
          %v171 = vmul.f32 %v169, 0.5
          %v172 = vmul.f32 %v170, 0.5
          %v173 = vsub.f32 %v157, %v171
          %v174 = vsub.f32 %v158, %v172
          %v175 = vmul.f32 %v173, %v173
          %v176 = vmul.f32 %v174, %v174
          %v179 = vrot.slane %v171, 7
          %v180 = vrot.slane %v172, 7
          %v183 = vsub.f32 %v157, %v179
          %v184 = vsub.f32 %v158, %v180
          %v185 = vmul.f32 %v183, %v183
          %v186 = vmul.f32 %v184, %v184
          %v189 = vrot.slane %v185, 7
          %v190 = vrot.slane %v189, 2
          %v191 = vrot.slane %v186, 7
          %v192 = vrot.slane %v191, 2
          %v195 = vadd.f32 %v175, %v190
          %v196 = vadd.f32 %v176, %v192
          %v197 = vmul.f32 %v195, 0.5
          %v198 = vmul.f32 %v196, 0.5
          %v199 = vadd.f32 %v197, 1e-08
          %v200 = vadd.f32 %v198, 1e-08
          %v201 = vrsqrt.pop %v199
          %v202 = vmul.f32 %v199, %v201
          %vm203 = vcmp.eq.f32.partialorder %v199, inf
          %v204 = vsel %vm203, %v199, %v202
          %vm205 = vcmp.eq.f32.partialorder %v199, 0.0
          %v206 = vand.u32 %v199, 2147483648
          %v207 = vsel %vm205, %v206, %v204
          %v208 = vrsqrt.pop %v200
          %v209 = vmul.f32 %v200, %v208
          %vm210 = vcmp.eq.f32.partialorder %v200, inf
          %v211 = vsel %vm210, %v200, %v209
          %vm212 = vcmp.eq.f32.partialorder %v200, 0.0
          %v213 = vand.u32 %v200, 2147483648
          %v214 = vsel %vm212, %v213, %v211
          %v217 = vlaneseq
          %v218 = vshrl.u32 %v217, 7
          %v219 = vsub.s32 0, %v218
          %v220 = vrot.slane %v207, %v219
          %v221 = vlaneseq
          %v222 = vshrl.u32 %v221, 7
          %v223 = vsub.s32 2, %v222
          %v224 = vrot.slane %v207, %v223
          %v225 = vlaneseq
          %v226 = vshrl.u32 %v225, 7
          %v227 = vsub.s32 4, %v226
          %v228 = vrot.slane %v207, %v227
          %v229 = vlaneseq
          %v230 = vshrl.u32 %v229, 7
          %v231 = vsub.s32 6, %v230
          %v232 = vrot.slane %v207, %v231
          %v233 = vlaneseq
          %v234 = vshrl.u32 %v233, 7
          %v235 = vsub.s32 0, %v234
          %v236 = vrot.slane %v214, %v235
          %v237 = vlaneseq
          %v238 = vshrl.u32 %v237, 7
          %v239 = vsub.s32 2, %v238
          %v240 = vrot.slane %v214, %v239
          %v241 = vlaneseq
          %v242 = vshrl.u32 %v241, 7
          %v243 = vsub.s32 4, %v242
          %v244 = vrot.slane %v214, %v243
          %v245 = vlaneseq
          %v246 = vshrl.u32 %v245, 7
          %v247 = vsub.s32 6, %v246
          %v248 = vrot.slane %v214, %v247
          %vm257 = vcmask 1040384
          %v258 = vsel %vm257, %v220, 0.0
          %v259 = vsel %vm257, %v224, 0.0
          %v260 = vadd.f32 %v258, %v259
          %v261 = vsel %vm257, %v228, 0.0
          %v262 = vadd.f32 %v260, %v261
          %v263 = vsel %vm257, %v232, 0.0
          %v264 = vadd.f32 %v262, %v263
          %v265 = vsel %vm257, %v236, 0.0
          %v266 = vadd.f32 %v264, %v265
          %v267 = vsel %vm257, %v240, 0.0
          %v268 = vadd.f32 %v266, %v267
          %v269 = vsel %vm257, %v244, 0.0
          %v270 = vadd.f32 %v268, %v269
          %v271 = vsel %vm257, %v248, 0.0
          %v272 = vadd.f32 %v270, %v271
          %273 = vadd.xlane.f32.xlu0 %v272
          %v274 = vpop.xlane.xlu0 %273
          %v275 = vld [vmem:[#allocation2] sm:$0x1]
          %v276 = vadd.f32 %v275, %v274
          %vm277 = vcmask 0
          %278 = vst.msk [vmem:[#allocation2] sm:$0x1] %vm277, %v276
        $region36: #{tpu_custom_call.1} parent=23 // pred_fallthru
          _
        %p279 = scmp.ge.s32.totalorder %s18, 1
        // Predicated region
        $region37: #{tpu_custom_call.1} parent=23 // pred_check
          %p280 = pneg %p279
        $region38: #{tpu_custom_call.1} parent=23 // pred_check_branch
          %282 = sbr.rel (%p280) target = $region40
        $region39: #{tpu_custom_call.1} parent=23 // pred_region
          %v283 = vld [vmem:[#allocation2] sm:$0x1]
          %v284 = vmul.f32 %v283, 0.0009765625
          %v286 = vlaneseq
          %v287 = vshrl.u32 %v286, 7
          %v288 = vsub.s32 0, %v287
          %v289 = vrot.slane %v284, %v288
          %vm291 = vcmask 1040384
          %v292 = vsel %vm291, %v284, %v289
          %294 = vset.pattern.permute.xlu0 0
          %295 = vperm.xlu0 %294, %v292
          %v296 = vpop.permute.xlu0 %295
          %v298 = vunpack.c.l.s4 269488144
          %v299 = vunpack.c.0.s8 %v298
          %v300 = vlaneseq
          %v301 = vshrl.u32 %v300, 7
          %v302 = vsub.s32 %v299, %v301
          %v303 = vrot.slane %v296, %v302
          %305 = vst [vmem:[%s138] sm:$0xff] %v303
          %306 = vst [vmem:[%s138 + $0x8] sm:$0xff] %v303
        $region40: #{tpu_custom_call.1} parent=23 // pred_fallthru
          _
        %s307 = sand.u32 %s56, 1
        %s308 = scalar_lea.sflag [#allocation5], %s307
        %s309 = sand.u32 %s56, 1
        %s310 = smul.addr %s309, 16
        %s311 = scalar_lea.vmem [#allocation6], %s310
        // Predicated region
        $region41: #{tpu_custom_call.1} parent=23 // pred_check
          %p312 = pneg %p66
        $region42: #{tpu_custom_call.1} parent=23 // pred_check_branch
          %314 = sbr.rel (%p312) target = $region44
        $region43: #{tpu_custom_call.1} parent=23 // pred_region
          %s315 = smul.u32 8, %s18
          %s316 = ssub.s32 10, %s315
          %p317 = scmp.lt.s32.totalorder %s316, 8
          %s318 = scalar_select %p317, %s316, 8
          %s319 = smul.u32 32, %s318
          %s321 = ssub.s32 256, %s319
          %322 = vsyncadd %s308, %s321
          %p323 = scmp.ne.s32.totalorder 0, %s319
          %s324 = smul.addr %s315, 32
          %s325 = scalar_lea.hbm %s1, %s324
          %s326 = smul.u32 %s318, 2
          %s327 = sshll.u32 %s326, 4
          %s328 = sshll.u32 %s311, 4
          %s329 = int_to_ptr.vmem [resolvable:$true] %s328
          %331 = dma.vmem_to_hbm [thread:$0]  (%p323), %s329, %s327, %s325, %s308
        $region44: #{tpu_custom_call.1} parent=23 // pred_fallthru
          _
      $region24: #{tpu_custom_call.1} parent=5 // pred_fallthru
        _
      %p332 = scmp.le.s32.totalorder 2, %s13
      // Predicated region
      $region45: #{tpu_custom_call.1} parent=5 // pred_check
        %p333 = pneg %p332
      $region46: #{tpu_custom_call.1} parent=5 // pred_check_branch
        %335 = sbr.rel (%p333) target = $region48
      $region47: #{tpu_custom_call.1} parent=5 // pred_region
        %s336 = ssub.s32 %s13, 2
        // Predicated region
        $region49: #{tpu_custom_call.1} parent=47 // pred_check
          %p337 = pneg %p72
        $region50: #{tpu_custom_call.1} parent=47 // pred_check_branch
          %339 = sbr.rel (%p337) target = $region52
        $region51: #{tpu_custom_call.1} parent=47 // pred_region
          %s340 = sand.u32 %s57, 1
          %s341 = scalar_lea.sflag [#allocation5], %s340
          %s342 = sand.u32 %s57, 1
          %s343 = smul.addr %s342, 16
          %s344 = scalar_lea.vmem [#allocation6], %s343
          %345 = dma.done %s341, 256
        $region52: #{tpu_custom_call.1} parent=47 // pred_fallthru
          _
      $region48: #{tpu_custom_call.1} parent=5 // pred_fallthru
        _
    $region6: #{tpu_custom_call.1} parent=1 // loop_footer
      %s17 = sadd.s32 1, %s13
    $region7: #{tpu_custom_call.1} parent=1 // loop_footer_branch
      %12 = sbr.rel target = $region3
    $region8: #{tpu_custom_call.1} parent=1 // loop_exit
      _
    %346 = vsyncpa [#allocation4], 1
    %s347 = scalar_lea.sflag [#allocation4], 1
    %348 = vsyncpa %s347, 1
    %349 = vsyncpa [#allocation5], 1
    %s350 = scalar_lea.sflag [#allocation5], 1
    %351 = vsyncpa %s350, 1

</llo_original>
